<compile_context>
chip_gen: v5e
topology: v5e:2x2
jax: 0.10.0
libtpu: 0.0.40
codegen_flags: <defaults>
</compile_context>

<pallas_src>
import jax
import jax.numpy as jnp
from jax.experimental import pallas as pl
from jax.experimental.pallas import tpu as pltpu


def _pos_embed_kernel(x_ref, pos_ref, o_ref):
    # x_ref/o_ref: (tb, ts, D) tile; pos_ref: (1, ts, D) tile, broadcast over
    # the leading (batch) dim. Elementwise add in the native dtype.
    o_ref[...] = x_ref[...] + pos_ref[...]


def positional_embedding_1d(x: jax.Array, pos_embedding: jax.Array) -> jax.Array:
    """x: (B, S, D), pos_embedding: (1, S, D) -> (B, S, D)."""
    B, S, D = x.shape
    assert pos_embedding.shape == (1, S, D)

    # The add happens in x's dtype (matches the typical all-bf16 ViT setup).
    # Note: if x is bf16 and pos is f32 this is a bf16 add, not f32 promotion.
    pos = pos_embedding.astype(x.dtype)

    itemsize = jnp.dtype(x.dtype).itemsize
    # Sublane granule for the S (second-to-last) block dim: 8 f32, 16 bf16,
    # 32 int8/fp8 — keeps vreg packing and stores unmasked for interior blocks.
    granule = max(8, 32 // itemsize)

    # Generation-aware VMEM capacity (v7x: 64 MiB/TC; v5e/v6e: 128 MiB).
    try:
        vmem_cap = int(pltpu.get_tpu_info().vmem_capacity_bytes)
    except Exception:
        vmem_cap = 64 * 1024 * 1024  # conservative (v7x) fallback

    # Target bytes per streamed x/out tile: ~8 MiB amortizes the ~0.35us/step
    # pipeline overhead to a few percent even on v7x, while double-buffered
    # {x, out} tiles (+ tiny pos tile) stay within the VMEM budget on all gens.
    margin = 2 * 1024 * 1024
    target_tile_bytes = min(
        8 * 1024 * 1024,
        max(512 * 1024, (int(vmem_cap * 0.6) - margin) // 4),
    )

    row_bytes = D * itemsize  # one sequence position over the full feature dim

    # Sequence (sublane) tile: full S if a single-batch-row tile fits the
    # target, otherwise the largest granule multiple that does. A ragged last
    # S block (S % ts != 0) is masked by Pallas.
    ts_cap = max(granule, (target_tile_bytes // row_bytes) // granule * granule)
    ts = S if S <= ts_cap else ts_cap

    # Batch tile: B is a leading (non-layout) block dim, so any tb is legal and
    # a ragged last block is masked. Fill the tile budget with batch rows.
    tb = int(max(1, min(B, target_tile_bytes // max(1, ts * row_bytes))))

    ns = pl.cdiv(S, ts)
    nb = pl.cdiv(B, tb)

    # Grid: S blocks outer, B blocks inner. pos's block index is constant along
    # the inner (batch) axis, so each pos tile is fetched from HBM exactly once
    # -> total pos traffic == S*D elements. Both axes are independent
    # ("parallel") for megacore sharding on v7x.
    grid = (ns, nb)

    x_tile_bytes = tb * ts * D * itemsize
    pos_tile_bytes = ts * D * itemsize
    vmem_needed = 4 * x_tile_bytes + 2 * pos_tile_bytes + margin  # 2-buf x + out, 2-buf pos
    vmem_limit = int(min(max(vmem_needed, 32 * 1024 * 1024), int(vmem_cap * 0.75)))

    out = pl.pallas_call(
        _pos_embed_kernel,
        out_shape=jax.ShapeDtypeStruct((B, S, D), x.dtype),
        grid_spec=pltpu.PrefetchScalarGridSpec(
            num_scalar_prefetch=0,
            grid=grid,
            in_specs=[
                pl.BlockSpec((tb, ts, D), lambda s, b: (b, s, 0)),  # x
                pl.BlockSpec((1, ts, D), lambda s, b: (0, s, 0)),   # pos (fetched once total)
            ],
            out_specs=pl.BlockSpec((tb, ts, D), lambda s, b: (b, s, 0)),
        ),
        compiler_params=pltpu.CompilerParams(
            dimension_semantics=("parallel", "parallel"),
            vmem_limit_bytes=vmem_limit,
        ),
    )(x, pos)

    return out


if __name__ == "__main__":
    # Small shapes consistent with the module's forward: (batch, seq_len, dim)
    B, S, D = 2, 8, 32
    key = jax.random.PRNGKey(0)
    kx, kp = jax.random.split(key)

    x = jax.random.normal(kx, (B, S, D), dtype=jnp.float32)
    # nn.Parameter(torch.zeros(1, seq_len, dim)) is zeros at init; use a small
    # deterministic nonzero value so the broadcast add is actually exercised.
    pos_embedding = jax.random.normal(kp, (1, S, D), dtype=jnp.float32) * 0.02

    out = positional_embedding_1d(x, pos_embedding)
    out = jax.block_until_ready(out)

    # Verify against the plain-JAX reference (broadcast add over batch).
    ref = x + pos_embedding
    assert out.shape == (B, S, D)
    assert out.dtype == x.dtype
    assert jnp.allclose(out, ref, atol=1e-6), "mismatch vs reference"

    print("KERNEL_OK")
</pallas_src>

<mosaic_0001>
module attributes {stable_mosaic.version = 11 : i64} {
  func.func @_pos_embed_kernel(%arg0: i32, %arg1: i32, %arg2: memref<2x8x32xf32, #tpu.memory_space<vmem>>, %arg3: memref<1x8x32xf32, #tpu.memory_space<vmem>>, %arg4: memref<2x8x32xf32, #tpu.memory_space<vmem>>) attributes {dimension_semantics = [#tpu.dimension_semantics<parallel>, #tpu.dimension_semantics<parallel>], iteration_bounds = array<i64: 1, 1>, scalar_prefetch = 0 : i64, scratch_operands = 0 : i64, tpu.core_type = #tpu.core_type<tc>, window_params = [{transform_indices = @transform_0, window_bounds = array<i64: 2, 8, 32>}, {transform_indices = @transform_1, window_bounds = array<i64: 1, 8, 32>}, {transform_indices = @transform_2, window_bounds = array<i64: 2, 8, 32>}]} {
    %c0 = arith.constant 0 : index
    %c0_0 = arith.constant 0 : index
    %c0_1 = arith.constant 0 : index
    %0 = vector.load %arg2[%c0, %c0_0, %c0_1] : memref<2x8x32xf32, #tpu.memory_space<vmem>>, vector<2x8x32xf32>
    %c0_2 = arith.constant 0 : index
    %c0_3 = arith.constant 0 : index
    %c0_4 = arith.constant 0 : index
    %1 = vector.load %arg3[%c0_2, %c0_3, %c0_4] : memref<1x8x32xf32, #tpu.memory_space<vmem>>, vector<1x8x32xf32>
    %2 = vector.broadcast %1 : vector<1x8x32xf32> to vector<2x8x32xf32>
    %3 = arith.addf %0, %2 : vector<2x8x32xf32>
    %c0_5 = arith.constant 0 : index
    %c0_6 = arith.constant 0 : index
    %c0_7 = arith.constant 0 : index
    %4 = vector.load %arg4[%c0_5, %c0_6, %c0_7] : memref<2x8x32xf32, #tpu.memory_space<vmem>>, vector<2x8x32xf32>
    tpu.vector_store %arg4[%c0_5, %c0_6, %c0_7], %3 {strides = array<i32>} : memref<2x8x32xf32, #tpu.memory_space<vmem>>, vector<2x8x32xf32>,
    return
  }
  func.func @transform_0(%arg0: i32, %arg1: i32) -> (i32, i32, i32) {
    %c0_i32 = arith.constant 0 : i32
    %c0_i32_0 = arith.constant 0 : i32
    return %arg1, %arg0, %c0_i32 : i32, i32, i32
  }
  func.func @transform_1(%arg0: i32, %arg1: i32) -> (i32, i32, i32) {
    %c0_i32 = arith.constant 0 : i32
    %c0_i32_0 = arith.constant 0 : i32
    %c0_i32_1 = arith.constant 0 : i32
    return %c0_i32, %arg0, %c0_i32_0 : i32, i32, i32
  }
  func.func @transform_2(%arg0: i32, %arg1: i32) -> (i32, i32, i32) {
    %c0_i32 = arith.constant 0 : i32
    %c0_i32_0 = arith.constant 0 : i32
    return %arg1, %arg0, %c0_i32 : i32, i32, i32
  }
}

</mosaic_0001>

<llo_original>
// kernel: tpu_custom_call.1
$region0: #{tpu_custom_call.1}
  #allocation0 [shape = 'u32[]', space=smem, size = 0x4, offset = 0x4, fixed_abs, tag = 'smem constant byte address 0x4 - core index']
  #allocation1 [shape = 'u32[72,128]{1,0:T(1,128)}', space=vmem, size = 0x9000, scoped, tag = 'internal scratch']
  %s0 = inlined_call_operand.hbm [shape: f32[2,8,32], index: 0, kind: input, shape index: {}]
  %s1 = inlined_call_operand.hbm [shape: f32[1,8,32], index: 1, kind: input, shape index: {}]
  %s2 = inlined_call_operand.hbm [shape: f32[2,8,32], index: 2, kind: output, shape index: {}]
  %s3 = sld [smem:[#allocation0]]
  $region26: #{tpu_custom_call.1} parent=0
    _
  %s5 = ssub.s32 1, %s3
  %s6 = scalar_select 0, %s5, %s3
  $region1: #{tpu_custom_call.1} parent=0
    #allocation2 [shape = 'u8[8192]{0}', space=vmem, size = 0x2000, scoped, tag = 'input window, operand 0, single buffered']
    #allocation3 [shape = 's32[1]{0}', space=sflag, size = 0x4, scoped, tag = 'scoped memory for tpu_custom_call.1']
    #allocation4 [shape = 's32[1]{0}', space=sflag, size = 0x4, scoped, tag = 'scoped memory for tpu_custom_call.1']
    #allocation5 [shape = 'u8[4096]{0}', space=vmem, size = 0x1000, scoped, tag = 'input window, operand 1, single buffered']
    #allocation6 [shape = 's32[1]{0}', space=sflag, size = 0x4, scoped, tag = 'scoped memory for tpu_custom_call.1']
    #allocation7 [shape = 'u8[8192]{0}', space=vmem, size = 0x2000, scoped, tag = 'output window, operand 0, single buffered']
    %7 = vsyncpa [#allocation3], 0
    %8 = vsyncpa [#allocation6], 0
    %9 = vsyncpa [#allocation4], 0
    // Predicated region
    $region2: #{tpu_custom_call.1} parent=1 // pred_check
      _
    $region3: #{tpu_custom_call.1} parent=1 // pred_check_branch
      %11 = sbr.rel (0) target = $region5
    $region4: #{tpu_custom_call.1} parent=1 // pred_region
      %13 = vsyncadd [#allocation3], 0
      %s14 = sshll.u32 %s0, 4
      %s15 = int_to_ptr.hbm [resolvable:$true] %s14
      %s16 = sshll.u32 [#allocation2], 4
      %s17 = int_to_ptr.vmem [resolvable:$true] %s16
      %22 = dma.hbm_to_vmem [thread:$0]  %s15, 256, %s17, [#allocation3], 128, 128, 8
    $region5: #{tpu_custom_call.1} parent=1 // pred_fallthru
      _
    // Predicated region
    $region6: #{tpu_custom_call.1} parent=1 // pred_check
      _
    $region7: #{tpu_custom_call.1} parent=1 // pred_check_branch
      %24 = sbr.rel (0) target = $region9
    $region8: #{tpu_custom_call.1} parent=1 // pred_region
      %26 = vsyncadd [#allocation6], 0
      %s28 = sshll.u32 %s1, 4
      %s29 = int_to_ptr.hbm [resolvable:$true] %s28
      %s30 = sshll.u32 [#allocation5], 4
      %s31 = int_to_ptr.vmem [resolvable:$true] %s30
      %33 = dma.hbm_to_vmem [thread:$0]  %s29, 128, %s31, [#allocation6]
    $region9: #{tpu_custom_call.1} parent=1 // pred_fallthru
      _
    // Predicated region
    $region10: #{tpu_custom_call.1} parent=1 // pred_check
      _
    $region11: #{tpu_custom_call.1} parent=1 // pred_check_branch
      %35 = sbr.rel (0) target = $region13
    $region12: #{tpu_custom_call.1} parent=1 // pred_region
      %37 = dma.done [#allocation3], 256
    $region13: #{tpu_custom_call.1} parent=1 // pred_fallthru
      _
    // Predicated region
    $region14: #{tpu_custom_call.1} parent=1 // pred_check
      _
    $region15: #{tpu_custom_call.1} parent=1 // pred_check_branch
      %39 = sbr.rel (0) target = $region17
    $region16: #{tpu_custom_call.1} parent=1 // pred_region
      %41 = dma.done [#allocation6], 128
    $region17: #{tpu_custom_call.1} parent=1 // pred_fallthru
      _
    %v42 = vld [vmem:[#allocation2] sm:$0xff]
    %v43 = vld [vmem:[#allocation2 + $0x8] sm:$0xff]
    %v44 = vld [vmem:[#allocation5] sm:$0xff]
    %v45 = vadd.f32 %v42, %v44
    %v46 = vadd.f32 %v43, %v44
    %vm47 = vcmask 261120
    %48 = vst.msk [vmem:[#allocation7] sm:$0xff] %vm47, %v45
    %49 = vst.msk [vmem:[#allocation7 + $0x8] sm:$0xff] %vm47, %v46
    // Predicated region
    $region18: #{tpu_custom_call.1} parent=1 // pred_check
      _
    $region19: #{tpu_custom_call.1} parent=1 // pred_check_branch
      %51 = sbr.rel (0) target = $region21
    $region20: #{tpu_custom_call.1} parent=1 // pred_region
      %53 = vsyncadd [#allocation4], 0
      %s54 = sshll.u32 [#allocation7], 4
      %s55 = int_to_ptr.vmem [resolvable:$true] %s54
      %s56 = sshll.u32 %s2, 4
      %s57 = int_to_ptr.hbm [resolvable:$true] %s56
      %62 = dma.vmem_to_hbm [thread:$0]  %s55, 256, %s57, [#allocation4], 128, 128, 8
    $region21: #{tpu_custom_call.1} parent=1 // pred_fallthru
      _
    // Predicated region
    $region22: #{tpu_custom_call.1} parent=1 // pred_check
      _
    $region23: #{tpu_custom_call.1} parent=1 // pred_check_branch
      %64 = sbr.rel (0) target = $region25
    $region24: #{tpu_custom_call.1} parent=1 // pred_region
      %66 = dma.done [#allocation4], 256
    $region25: #{tpu_custom_call.1} parent=1 // pred_fallthru
      _
    %67 = vsyncpa [#allocation3], 1
    %68 = vsyncpa [#allocation6], 1
    %69 = vsyncpa [#allocation4], 1

</llo_original>
